<compile_context>
chip_gen: v7x
topology: tpu7x:2x2x1
jax: 0.10.0
libtpu: 0.0.40
codegen_flags: <defaults>
</compile_context>

<pallas_src>
import functools

import jax
import jax.numpy as jnp
from jax.experimental import pallas as pl
from jax.experimental.pallas import tpu as pltpu


def _la_silu_kernel(x_ref, o_ref, *, alpha, inv_n, inv_nm1):
    x = x_ref[...].astype(jnp.float32)                      # (bt, D), f32 accum
    mean = jnp.sum(x, axis=-1, keepdims=True) * inv_n       # (bt, 1)
    diff = x - mean
    var = jnp.sum(diff * diff, axis=-1, keepdims=True) * inv_nm1
    inv_std = jax.lax.rsqrt(var + alpha)                    # per-row scalar
    s = jax.nn.sigmoid(diff * inv_std)                      # EUP exp
    o_ref[...] = (s * x).astype(o_ref.dtype)


def la_silu(x, alpha=1e-5):
    """LA_SiLU forward.  x: (N, ...) array; reduces over all non-batch dims."""
    N = x.shape[0]
    D = 1
    for d in x.shape[1:]:
        D *= d
    x2 = x.reshape(N, D)
    itemsize = jnp.dtype(x.dtype).itemsize

    # Rows (samples) per grid step: whole batch if small, else a multiple of 8
    # sized so each input block is ~2 MiB.
    target_block_bytes = 2 * 1024 * 1024
    rows_target = max(1, target_block_bytes // max(1, D * itemsize))
    if rows_target >= N:
        bt = N                                       # full batch, one grid step
    else:
        bt = min(N, max(8, (rows_target // 8) * 8))  # multiple of 8 (sublane rule)
    grid = (pl.cdiv(N, bt),)
    # TODO(synk): add a chunked two-phase (accumulate sum/sumsq, then re-stream)
    # path for samples whose single f32 row exceeds v7x's 64 MiB VMEM.

    block_bytes = bt * D * itemsize
    vmem_limit = int(min(96 * 2**20, max(32 * 2**20, 8 * block_bytes)))

    kernel = functools.partial(
        _la_silu_kernel,
        alpha=float(alpha),
        inv_n=1.0 / float(D),
        inv_nm1=1.0 / float(max(D - 1, 1)),  # guard the D == 1 degenerate case
    )

    cost = pl.CostEstimate(
        flops=10 * N * D,
        transcendentals=N * D,
        bytes_accessed=2 * N * D * itemsize,
    )

    out = pl.pallas_call(
        kernel,
        out_shape=jax.ShapeDtypeStruct((N, D), x.dtype),
        grid_spec=pltpu.PrefetchScalarGridSpec(
            num_scalar_prefetch=0,
            grid=grid,
            in_specs=[pl.BlockSpec((bt, D), lambda i: (i, 0))],
            out_specs=pl.BlockSpec((bt, D), lambda i: (i, 0)),
        ),
        compiler_params=pltpu.CompilerParams(
            dimension_semantics=("parallel",),
            vmem_limit_bytes=vmem_limit,
        ),
        cost_estimate=cost,
    )(x2)
    return out.reshape(x.shape)


def la_silu_reference(x, alpha=1e-5):
    xf = x.astype(jnp.float32)
    N = x.shape[0]
    flat = xf.reshape(N, -1)
    bshape = (N,) + (1,) * (x.ndim - 1)
    mean = flat.mean(axis=1).reshape(bshape)
    var = flat.var(axis=1, ddof=1).reshape(bshape)
    n = (xf - mean) / jnp.sqrt(var + alpha)
    return (jax.nn.sigmoid(n) * xf).astype(x.dtype)


if __name__ == "__main__":
    key = jax.random.PRNGKey(0)
    x = jax.random.normal(key, (2, 4, 16, 16), dtype=jnp.float32)

    out = la_silu(x, alpha=1e-5)
    out = jax.block_until_ready(out)

    ref = la_silu_reference(x, alpha=1e-5)
    assert out.shape == x.shape and out.dtype == x.dtype
    assert jnp.allclose(out, ref, atol=1e-5, rtol=1e-5)

    print("KERNEL_OK")
</pallas_src>

<mosaic_0001>
module attributes {stable_mosaic.version = 11 : i64} {
  func.func @_la_silu_kernel(%arg0: i32, %arg1: memref<2x1024xf32, #tpu.memory_space<vmem>>, %arg2: memref<2x1024xf32, #tpu.memory_space<vmem>>) attributes {dimension_semantics = [#tpu.dimension_semantics<parallel>], iteration_bounds = array<i64: 1>, scalar_prefetch = 0 : i64, scratch_operands = 0 : i64, tpu.core_type = #tpu.core_type<tc>, window_params = [{transform_indices = @transform_0, window_bounds = array<i64: 2, 1024>}, {transform_indices = @transform_1, window_bounds = array<i64: 2, 1024>}]} {
    %c0 = arith.constant 0 : index
    %c0_0 = arith.constant 0 : index
    %0 = vector.load %arg1[%c0, %c0_0] : memref<2x1024xf32, #tpu.memory_space<vmem>>, vector<2x1024xf32>
    %cst = arith.constant dense<0.000000e+00> : vector<2xf32>
    %1 = vector.multi_reduction <add>, %0, %cst [1] : vector<2x1024xf32> to vector<2xf32>
    %2 = vector.shape_cast %1 : vector<2xf32> to vector<2x1xf32>
    %cst_1 = arith.constant 9.765625E-4 : f32
    %3 = vector.broadcast %cst_1 : f32 to vector<2x1xf32>
    %4 = arith.mulf %2, %3 : vector<2x1xf32>
    %5 = vector.broadcast %4 : vector<2x1xf32> to vector<2x1024xf32>
    %6 = arith.subf %0, %5 : vector<2x1024xf32>
    %7 = arith.mulf %6, %6 : vector<2x1024xf32>
    %cst_2 = arith.constant dense<0.000000e+00> : vector<2xf32>
    %8 = vector.multi_reduction <add>, %7, %cst_2 [1] : vector<2x1024xf32> to vector<2xf32>
    %9 = vector.shape_cast %8 : vector<2xf32> to vector<2x1xf32>
    %cst_3 = arith.constant 9.77517105E-4 : f32
    %10 = vector.broadcast %cst_3 : f32 to vector<2x1xf32>
    %11 = arith.mulf %9, %10 : vector<2x1xf32>
    %cst_4 = arith.constant 9.99999974E-6 : f32
    %12 = vector.broadcast %cst_4 : f32 to vector<2x1xf32>
    %13 = arith.addf %11, %12 : vector<2x1xf32>
    %14 = math.rsqrt %13 : vector<2x1xf32>
    %15 = vector.broadcast %14 : vector<2x1xf32> to vector<2x1024xf32>
    %16 = arith.mulf %6, %15 : vector<2x1024xf32>
    %17 = arith.negf %16 : vector<2x1024xf32>
    %18 = math.exp %17 : vector<2x1024xf32>
    %cst_5 = arith.constant 1.000000e+00 : f32
    %19 = vector.broadcast %cst_5 : f32 to vector<2x1024xf32>
    %20 = arith.addf %19, %18 : vector<2x1024xf32>
    %21 = arith.divf %19, %20 : vector<2x1024xf32>
    %22 = arith.mulf %21, %0 : vector<2x1024xf32>
    %c0_6 = arith.constant 0 : index
    %c0_7 = arith.constant 0 : index
    %23 = vector.load %arg2[%c0_6, %c0_7] : memref<2x1024xf32, #tpu.memory_space<vmem>>, vector<2x1024xf32>
    tpu.vector_store %arg2[%c0_6, %c0_7], %22 {strides = array<i32>} : memref<2x1024xf32, #tpu.memory_space<vmem>>, vector<2x1024xf32>,
    return
  }
  func.func @transform_0(%arg0: i32) -> (i32, i32) {
    %c0_i32 = arith.constant 0 : i32
    %c0_i32_0 = arith.constant 0 : i32
    return %arg0, %c0_i32 : i32, i32
  }
  func.func @transform_1(%arg0: i32) -> (i32, i32) {
    %c0_i32 = arith.constant 0 : i32
    %c0_i32_0 = arith.constant 0 : i32
    return %arg0, %c0_i32 : i32, i32
  }
}

</mosaic_0001>

<llo_original>
// kernel: tpu_custom_call.1
$region0: #{tpu_custom_call.1}
  #allocation0 [shape = 'u32[]', space=smem, size = 0x4, offset = 0x4, fixed_abs, tag = 'smem constant byte address 0x4 - core index']
  #allocation1 [shape = 'u32[144,128]{1,0:T(1,128)}', space=vmem, size = 0x12000, scoped, tag = 'internal scratch']
  %s0 = inlined_call_operand.hbm [shape: f32[2,1024], index: 0, kind: input, shape index: {}]
  %s1 = inlined_call_operand.hbm [shape: f32[2,1024], index: 1, kind: output, shape index: {}]
  %s2 = sld [smem:[#allocation0]]
  $region18: #{tpu_custom_call.1} parent=0
    _
  %s4 = ssub.s32 1, %s2
  %s5 = scalar_select 0, %s4, %s2
  $region1: #{tpu_custom_call.1} parent=0
    #allocation2 [shape = 'u8[8192]{0}', space=vmem, size = 0x2000, scoped, tag = 'input window, operand 0, single buffered']
    #allocation3 [shape = 's32[1]{0}', space=sflag, size = 0x4, scoped, tag = 'scoped memory for tpu_custom_call.1']
    #allocation4 [shape = 's32[1]{0}', space=sflag, size = 0x4, scoped, tag = 'scoped memory for tpu_custom_call.1']
    #allocation5 [shape = 'u8[8192]{0}', space=vmem, size = 0x2000, scoped, tag = 'output window, operand 0, single buffered']
    %6 = vsyncpa [#allocation3], 0
    %7 = vsyncpa [#allocation4], 0
    // Predicated region
    $region2: #{tpu_custom_call.1} parent=1 // pred_check
      _
    $region3: #{tpu_custom_call.1} parent=1 // pred_check_branch
      %9 = sbr.rel (0) target = $region5
    $region4: #{tpu_custom_call.1} parent=1 // pred_region
      %s11 = ssub.s32 256, 256
      %12 = vsyncadd [#allocation3], %s11
      %s14 = sshll.u32 [#allocation2], 4
      %s15 = int_to_ptr.vmem [resolvable:$true] %s14
      %17 = dma.hbm_to_vmem [thread:$0]  %s0, 256, %s15, [#allocation3]
    $region5: #{tpu_custom_call.1} parent=1 // pred_fallthru
      _
    // Predicated region
    $region6: #{tpu_custom_call.1} parent=1 // pred_check
      _
    $region7: #{tpu_custom_call.1} parent=1 // pred_check_branch
      %19 = sbr.rel (0) target = $region9
    $region8: #{tpu_custom_call.1} parent=1 // pred_region
      %20 = dma.done [#allocation3], 256
    $region9: #{tpu_custom_call.1} parent=1 // pred_fallthru
      _
    %v21 = vld [vmem:[#allocation2] sm:$0xff]
    %v22 = vld [vmem:[#allocation2 + $0x8] sm:$0xff]
    %v25 = vcombine.high %v21, %v21
    %v27 = vunpack.c.l.s4 1983009808
    %v28 = vunpack.c.0.s8 %v27
    %v29 = vlaneseq
    %v30 = vshrl.u32 %v29, 7
    %v31 = vsub.s32 %v28, %v30
    %v32 = vrot.slane %v21, %v31
    %v34 = vunpack.c.l.s4 1983009808
    %v35 = vunpack.c.0.s8 %v34
    %v36 = vlaneseq
    %v37 = vshrl.u32 %v36, 7
    %v38 = vsub.s32 %v35, %v37
    %v39 = vrot.slane %v25, %v38
    %v40 = vcombine.high %v32, %v32
    %v41 = vcombine.high %v39, %v39
    %v42 = vcombine.high %v22, %v22
    %v44 = vunpack.c.l.s4 1983009808
    %v45 = vunpack.c.0.s8 %v44
    %v46 = vlaneseq
    %v47 = vshrl.u32 %v46, 7
    %v48 = vsub.s32 %v45, %v47
    %v49 = vrot.slane %v22, %v48
    %v51 = vunpack.c.l.s4 1983009808
    %v52 = vunpack.c.0.s8 %v51
    %v53 = vlaneseq
    %v54 = vshrl.u32 %v53, 7
    %v55 = vsub.s32 %v52, %v54
    %v56 = vrot.slane %v42, %v55
    %v57 = vcombine.high %v49, %v49
    %v58 = vcombine.high %v56, %v56
    %vm67 = vcmask 1041408
    %v68 = vsel %vm67, %v32, 0.0
    %v69 = vsel %vm67, %v40, 0.0
    %v70 = vadd.f32 %v68, %v69
    %v71 = vsel %vm67, %v39, 0.0
    %v72 = vadd.f32 %v70, %v71
    %v73 = vsel %vm67, %v41, 0.0
    %v74 = vadd.f32 %v72, %v73
    %v75 = vsel %vm67, %v49, 0.0
    %v76 = vadd.f32 %v74, %v75
    %v77 = vsel %vm67, %v57, 0.0
    %v78 = vadd.f32 %v76, %v77
    %v79 = vsel %vm67, %v56, 0.0
    %v80 = vadd.f32 %v78, %v79
    %v81 = vsel %vm67, %v58, 0.0
    %v82 = vadd.f32 %v80, %v81
    %83 = vadd.xlane.f32.xlu0 %v82
    %v84 = vpop.xlane.xlu0 %83
    %v85 = vmul.f32 %v84, 0.0009765625
    %v88 = vunpack.c.l.s4 269488144
    %v89 = vunpack.c.0.s8 %v88
    %v90 = vlaneseq
    %v91 = vshrl.u32 %v90, 7
    %v92 = vsub.s32 %v89, %v91
    %v93 = vrot.slane %v85, %v92
    %v95 = vsub.f32 %v21, %v93
    %v96 = vsub.f32 %v22, %v93
    %v97 = vmul.f32 %v95, %v95
    %v98 = vmul.f32 %v96, %v96
    %v101 = vcombine.high %v97, %v97
    %v103 = vunpack.c.l.s4 1983009808
    %v104 = vunpack.c.0.s8 %v103
    %v105 = vlaneseq
    %v106 = vshrl.u32 %v105, 7
    %v107 = vsub.s32 %v104, %v106
    %v108 = vrot.slane %v97, %v107
    %v110 = vunpack.c.l.s4 1983009808
    %v111 = vunpack.c.0.s8 %v110
    %v112 = vlaneseq
    %v113 = vshrl.u32 %v112, 7
    %v114 = vsub.s32 %v111, %v113
    %v115 = vrot.slane %v101, %v114
    %v116 = vcombine.high %v108, %v108
    %v117 = vcombine.high %v115, %v115
    %v118 = vcombine.high %v98, %v98
    %v120 = vunpack.c.l.s4 1983009808
    %v121 = vunpack.c.0.s8 %v120
    %v122 = vlaneseq
    %v123 = vshrl.u32 %v122, 7
    %v124 = vsub.s32 %v121, %v123
    %v125 = vrot.slane %v98, %v124
    %v127 = vunpack.c.l.s4 1983009808
    %v128 = vunpack.c.0.s8 %v127
    %v129 = vlaneseq
    %v130 = vshrl.u32 %v129, 7
    %v131 = vsub.s32 %v128, %v130
    %v132 = vrot.slane %v118, %v131
    %v133 = vcombine.high %v125, %v125
    %v134 = vcombine.high %v132, %v132
    %v143 = vsel %vm67, %v108, 0.0
    %v144 = vsel %vm67, %v116, 0.0
    %v145 = vadd.f32 %v143, %v144
    %v146 = vsel %vm67, %v115, 0.0
    %v147 = vadd.f32 %v145, %v146
    %v148 = vsel %vm67, %v117, 0.0
    %v149 = vadd.f32 %v147, %v148
    %v150 = vsel %vm67, %v125, 0.0
    %v151 = vadd.f32 %v149, %v150
    %v152 = vsel %vm67, %v133, 0.0
    %v153 = vadd.f32 %v151, %v152
    %v154 = vsel %vm67, %v132, 0.0
    %v155 = vadd.f32 %v153, %v154
    %v156 = vsel %vm67, %v134, 0.0
    %v157 = vadd.f32 %v155, %v156
    %158 = vadd.xlane.f32.xlu0 %v157
    %v159 = vpop.xlane.xlu0 %158
    %v160 = vmul.f32 %v159, 0.0009775171
    %v161 = vadd.f32 %v160, 1e-05
    %v162 = vrsqrt.pop %v161
    %v165 = vunpack.c.l.s4 269488144
    %v166 = vunpack.c.0.s8 %v165
    %v167 = vlaneseq
    %v168 = vshrl.u32 %v167, 7
    %v169 = vsub.s32 %v166, %v168
    %v170 = vrot.slane %v162, %v169
    %v172 = vmul.f32 %v95, %v170
    %v173 = vmul.f32 %v96, %v170
    %v174 = vxor.u32 %v172, 2147483648
    %v175 = vxor.u32 %v173, 2147483648
    %v176 = vmul.f32 %v174, 1.442695
    %v177 = vpow.pop %v176
    %v178 = vmul.f32 %v175, 1.442695
    %v179 = vpow.pop %v178
    %v180 = vadd.f32 %v177, 1.0
    %v181 = vadd.f32 %v179, 1.0
    %v182 = vrcp.pop %v180
    %v183 = vmul.f32 1.0, %v182
    %v184 = vrcp.pop %v181
    %v185 = vmul.f32 1.0, %v184
    %v186 = vmul.f32 %v183, %v21
    %v187 = vmul.f32 %v185, %v22
    %188 = vst [vmem:[#allocation5] sm:$0xff] %v186
    %189 = vst [vmem:[#allocation5 + $0x8] sm:$0xff] %v187
    // Predicated region
    $region10: #{tpu_custom_call.1} parent=1 // pred_check
      _
    $region11: #{tpu_custom_call.1} parent=1 // pred_check_branch
      %191 = sbr.rel (0) target = $region13
    $region12: #{tpu_custom_call.1} parent=1 // pred_region
      %s193 = ssub.s32 256, 256
      %194 = vsyncadd [#allocation4], %s193
      %s196 = sshll.u32 [#allocation5], 4
      %s197 = int_to_ptr.vmem [resolvable:$true] %s196
      %199 = dma.vmem_to_hbm [thread:$0]  %s197, 256, %s1, [#allocation4]
    $region13: #{tpu_custom_call.1} parent=1 // pred_fallthru
      _
    // Predicated region
    $region14: #{tpu_custom_call.1} parent=1 // pred_check
      _
    $region15: #{tpu_custom_call.1} parent=1 // pred_check_branch
      %201 = sbr.rel (0) target = $region17
    $region16: #{tpu_custom_call.1} parent=1 // pred_region
      %202 = dma.done [#allocation4], 256
    $region17: #{tpu_custom_call.1} parent=1 // pred_fallthru
      _
    %203 = vsyncpa [#allocation3], 1
    %204 = vsyncpa [#allocation4], 1

</llo_original>
